<compile_context>
chip_gen: v6e
topology: v6e:2x2x1
jax: 0.10.0
libtpu: 0.0.40
codegen_flags: <defaults>
</compile_context>

<pallas_src>
import jax
import jax.numpy as jnp
from jax.experimental import pallas as pl
from jax.experimental.pallas import tpu as pltpu


def _round_up(x, m):
    return ((x + m - 1) // m) * m


# --------------------------------------------------------------------------- #
# Kernel
# --------------------------------------------------------------------------- #
def _head_kernel(x_ref, wt_ref, b_ref, o_ref, acc_ref):
    # x_ref:  (tb, tk)  VMEM, activation dtype (f32 kept in HBM even for bf16 W)
    # wt_ref: (tk, tn)  VMEM, weight compute dtype (pre-transposed, N padded)
    # b_ref:  (1,  tn)  VMEM, f32
    # o_ref:  (tb, tn)  VMEM, out dtype
    # acc_ref:(tb, tn)  VMEM scratch, f32 accumulator across the K grid axis
    k = pl.program_id(2)

    @pl.when(k == 0)
    def _init():
        acc_ref[...] = jnp.zeros_like(acc_ref)

    # Cast x to the weight dtype *in VMEM* (no wrapper-side HBM pass); MXU
    # accumulates in f32 regardless.
    acc_ref[...] += jnp.dot(
        x_ref[...].astype(wt_ref.dtype), wt_ref[...],
        preferred_element_type=jnp.float32)

    @pl.when(k == pl.num_programs(2) - 1)
    def _finish():
        o_ref[...] = (acc_ref[...] + b_ref[...]).astype(o_ref.dtype)


# --------------------------------------------------------------------------- #
# One-time parameter preparation (NOT per forward)
# --------------------------------------------------------------------------- #
def prepare_head_params(weight, bias, compute_dtype=jnp.float32):
    """Transpose (N, D) -> (D, N) and pad N up to a multiple of 128 so kernel
    output stores are lane-dense. Returns (wt_padded, bias_padded)."""
    N, D = weight.shape
    assert bias.shape == (N,)
    n_pad = _round_up(max(N, 128), 128)
    wt = jnp.zeros((D, n_pad), dtype=compute_dtype)
    wt = wt.at[:, :N].set(weight.T.astype(compute_dtype))
    b = jnp.zeros((1, n_pad), dtype=jnp.float32)
    b = b.at[:, :N].set(bias.astype(jnp.float32).reshape(1, N))
    return wt, b


# --------------------------------------------------------------------------- #
# Tile selection
# --------------------------------------------------------------------------- #
def _vmem_capacity_bytes():
    try:
        return int(pltpu.get_tpu_info().vmem_capacity_bytes)
    except Exception:
        return 64 * 1024 * 1024  # conservative: v7x per-TensorCore VMEM


def _k_tile_candidates(D, cap):
    """K tile sizes that divide D exactly (no garbage columns in the reduction),
    multiples of 128, largest first. Falls back to full-D if D % 128 != 0."""
    cands = [D] if D <= cap else []
    if D % 128 == 0:
        cands += [k for k in range(min(cap, D), 127, -128) if D % k == 0]
    if not cands:
        cands = [D]  # full-K fallback (block dim == full array dim is legal)
    return cands


def _choose_tiles(B, D, n_pad, w_item, x_item, out_item, budget, tk_cap):
    # Batch tile: big, but guarantee >= 2 batch blocks when B >= 16 so v7x's
    # two TensorCores both get work on the "parallel" axis.
    tb = min(512, _round_up(B, 8))
    if B >= 16:
        tb = min(tb, _round_up(pl.cdiv(B, 2), 8))
    if B >= 256 and tb >= 256:
        tb = 256 * (tb // 256)          # 256-aligned M tiles for v6e/v7x MXU
    tn = min(512, n_pad)

    def fits(tb_, tn_, tk_):
        xb = tb_ * tk_ * x_item         # x block
        wb = tk_ * tn_ * w_item         # weight block
        bb = tn_ * 4                    # bias block
        ob = tb_ * tn_ * out_item       # output block
        acc = tb_ * tn_ * 4             # accumulator scratch (single copy)
        return 2 * (xb + wb + bb + ob) + acc <= budget

    k_cands = _k_tile_candidates(D, tk_cap)
    tk = k_cands[-1]
    for cand in k_cands:
        if fits(tb, tn, cand):
            tk = cand
            break
    while not fits(tb, tn, tk) and tn > 128:
        tn -= 128
    while not fits(tb, tn, tk) and tb > 8:
        tb = max(8, _round_up(tb // 2, 8))
    return tb, tn, tk


# --------------------------------------------------------------------------- #
# Forward
# --------------------------------------------------------------------------- #
def head_forward(x, wt_pad, b_pad, num_classes, *, out_dtype=jnp.float32,
                 tk_cap=2048):
    """out = x @ weight.T + bias. x: (B, D) (any float dtype; NOT cast in the
    wrapper). wt_pad/b_pad from prepare_head_params. Returns (B, num_classes)."""
    B, D = x.shape
    Dw, n_pad = wt_pad.shape
    assert D == Dw

    vmem_cap = _vmem_capacity_bytes()
    vmem_limit = min(int(vmem_cap * 0.625), 96 * 1024 * 1024)
    tile_budget = vmem_limit // 2

    x_item = jnp.dtype(x.dtype).itemsize
    w_item = jnp.dtype(wt_pad.dtype).itemsize
    out_item = jnp.dtype(out_dtype).itemsize

    tb, tn, tk = _choose_tiles(B, D, n_pad, w_item, x_item, out_item,
                               tile_budget, tk_cap)
    grid = (pl.cdiv(B, tb), pl.cdiv(n_pad, tn), pl.cdiv(D, tk))
    gi, gj, gk = grid

    # Single-buffer any block whose index never changes over the whole grid
    # (no second VMEM copy ever used); default double-buffering otherwise.
    x_mode = pl.Buffered(1) if (gi == 1 and gk == 1) else None
    w_mode = pl.Buffered(1) if (gj == 1 and gk == 1) else None
    b_mode = pl.Buffered(1) if gj == 1 else None

    cost = pl.CostEstimate(
        flops=2 * B * D * n_pad,
        transcendentals=0,
        bytes_accessed=(B * D * x_item + D * n_pad * w_item
                        + n_pad * 4 + B * n_pad * out_item))

    out_pad = pl.pallas_call(
        _head_kernel,
        out_shape=jax.ShapeDtypeStruct((B, n_pad), out_dtype),
        grid_spec=pltpu.PrefetchScalarGridSpec(
            num_scalar_prefetch=0,
            grid=grid,
            in_specs=[
                pl.BlockSpec((tb, tk), lambda i, j, k: (i, k),
                             pipeline_mode=x_mode),
                pl.BlockSpec((tk, tn), lambda i, j, k: (k, j),
                             pipeline_mode=w_mode),
                pl.BlockSpec((1, tn), lambda i, j, k: (0, j),
                             pipeline_mode=b_mode),
            ],
            out_specs=pl.BlockSpec((tb, tn), lambda i, j, k: (i, j)),
            scratch_shapes=[pltpu.VMEM((tb, tn), jnp.float32)],
        ),
        compiler_params=pltpu.CompilerParams(
            dimension_semantics=("parallel", "parallel", "arbitrary"),
            vmem_limit_bytes=vmem_limit,
        ),
        cost_estimate=cost,
    )(x, wt_pad, b_pad)

    if n_pad == num_classes:
        return out_pad
    # Strip the N-padding (cheap XLA slice outside the kernel).
    return out_pad[:, :num_classes]


# --------------------------------------------------------------------------- #
# Demo / self-test
# --------------------------------------------------------------------------- #
if __name__ == "__main__":
    # Small shapes consistent with Head(input_dim, num_classes):
    # batch=32, input_dim=512, num_classes=10.
    # (Real module default is input_dim=256*7*7=12544; K tiling handles it.)
    B, D, N = 32, 512, 10

    key = jax.random.PRNGKey(0)
    kx, kw, kb = jax.random.split(key, 3)

    x = jax.random.normal(kx, (B, D), dtype=jnp.float32)
    bound = 1.0 / (D ** 0.5)
    weight = jax.random.uniform(kw, (N, D), jnp.float32, -bound, bound)
    bias = jax.random.uniform(kb, (N,), jnp.float32, -bound, bound)

    ref = jnp.dot(x, weight.T, precision=jax.lax.Precision.HIGHEST) + bias

    fwd = jax.jit(head_forward, static_argnames=("num_classes", "tk_cap"))

    # --- f32 path (single K block -> weight/bias blocks single-buffered) ---
    wt_f32, b_f32 = prepare_head_params(weight, bias, compute_dtype=jnp.float32)
    out = jax.block_until_ready(fwd(x, wt_f32, b_f32, num_classes=N))
    assert out.shape == (B, N)
    assert jnp.allclose(out, ref, atol=2e-4, rtol=2e-4), "f32 mismatch"

    # --- f32 path with a forced small K tile: exercises the K-grid
    #     accumulator (init / accumulate / finalize via pl.when) ---
    out_kt = jax.block_until_ready(
        fwd(x, wt_f32, b_f32, num_classes=N, tk_cap=128))
    assert out_kt.shape == (B, N)
    assert jnp.allclose(out_kt, ref, atol=2e-4, rtol=2e-4), "K-tiled mismatch"

    # --- bf16-weight path: x stays f32 in HBM (no wrapper-side cast); the
    #     downcast to bf16 happens in VMEM inside the kernel, f32 accumulate ---
    wt_bf16, b_bf16 = prepare_head_params(weight, bias, compute_dtype=jnp.bfloat16)
    out_bf16 = jax.block_until_ready(fwd(x, wt_bf16, b_bf16, num_classes=N))
    assert out_bf16.shape == (B, N)
    assert jnp.allclose(out_bf16, ref, atol=5e-2, rtol=5e-2), "bf16 mismatch"

    print("KERNEL_OK")
</pallas_src>

<mosaic_0001>
module attributes {stable_mosaic.version = 11 : i64} {
  func.func @_head_kernel(%arg0: i32, %arg1: i32, %arg2: i32, %arg3: memref<16x512xf32, #tpu.memory_space<vmem>>, %arg4: memref<512x128xf32, #tpu.memory_space<vmem>>, %arg5: memref<1x128xf32, #tpu.memory_space<vmem>>, %arg6: memref<16x128xf32, #tpu.memory_space<vmem>>, %arg7: memref<16x128xf32, #tpu.memory_space<vmem>>) attributes {dimension_semantics = [#tpu.dimension_semantics<parallel>, #tpu.dimension_semantics<parallel>, #tpu.dimension_semantics<arbitrary>], iteration_bounds = array<i64: 2, 1, 1>, scalar_prefetch = 0 : i64, scratch_operands = 1 : i64, tpu.core_type = #tpu.core_type<tc>, window_params = [{transform_indices = @transform_0, window_bounds = array<i64: 16, 512>}, {pipeline_mode = #tpu.pipeline_mode<synchronous>, transform_indices = @transform_1, window_bounds = array<i64: 512, 128>}, {pipeline_mode = #tpu.pipeline_mode<synchronous>, transform_indices = @transform_2, window_bounds = array<i64: 1, 128>}, {transform_indices = @transform_3, window_bounds = array<i64: 16, 128>}]} {
    %c0_i32 = arith.constant 0 : i32
    %0 = arith.cmpi eq, %arg2, %c0_i32 : i32
    %1 = arith.extui %0 : i1 to i32
    %c0_i32_0 = arith.constant 0 : i32
    %2 = arith.cmpi ne, %1, %c0_i32_0 : i32
    scf.if %2 {
      %cst_10 = arith.constant 0.000000e+00 : f32
      %12 = vector.broadcast %cst_10 : f32 to vector<16x128xf32>
      %c0_11 = arith.constant 0 : index
      %c0_12 = arith.constant 0 : index
      %13 = vector.load %arg7[%c0_11, %c0_12] : memref<16x128xf32, #tpu.memory_space<vmem>>, vector<16x128xf32>
      tpu.vector_store %arg7[%c0_11, %c0_12], %12 {strides = array<i32>} : memref<16x128xf32, #tpu.memory_space<vmem>>, vector<16x128xf32>,
    } else {
    }
    %c0 = arith.constant 0 : index
    %c0_1 = arith.constant 0 : index
    %3 = vector.load %arg7[%c0, %c0_1] : memref<16x128xf32, #tpu.memory_space<vmem>>, vector<16x128xf32>
    %c0_2 = arith.constant 0 : index
    %c0_3 = arith.constant 0 : index
    %4 = vector.load %arg3[%c0_2, %c0_3] : memref<16x512xf32, #tpu.memory_space<vmem>>, vector<16x512xf32>
    %c0_4 = arith.constant 0 : index
    %c0_5 = arith.constant 0 : index
    %5 = vector.load %arg4[%c0_4, %c0_5] : memref<512x128xf32, #tpu.memory_space<vmem>>, vector<512x128xf32>
    %cst = arith.constant dense<0.000000e+00> : vector<16x128xf32>
    %6 = tpu.matmul %4, %5, %cst {dimension_numbers = #tpu.dot_dimension_numbers<[1], [0], [0], [1], [0, 0, 1, 1], [], []>} : vector<16x512xf32>, vector<512x128xf32>, vector<16x128xf32> -> vector<16x128xf32>
    %7 = arith.addf %3, %6 : vector<16x128xf32>
    %c0_6 = arith.constant 0 : index
    %c0_7 = arith.constant 0 : index
    %8 = vector.load %arg7[%c0_6, %c0_7] : memref<16x128xf32, #tpu.memory_space<vmem>>, vector<16x128xf32>
    tpu.vector_store %arg7[%c0_6, %c0_7], %7 {strides = array<i32>} : memref<16x128xf32, #tpu.memory_space<vmem>>, vector<16x128xf32>,
    %c0_i32_8 = arith.constant 0 : i32
    %9 = arith.cmpi eq, %arg2, %c0_i32_8 : i32
    %10 = arith.extui %9 : i1 to i32
    %c0_i32_9 = arith.constant 0 : i32
    %11 = arith.cmpi ne, %10, %c0_i32_9 : i32
    scf.if %11 {
      %c0_10 = arith.constant 0 : index
      %c0_11 = arith.constant 0 : index
      %12 = vector.load %arg7[%c0_10, %c0_11] : memref<16x128xf32, #tpu.memory_space<vmem>>, vector<16x128xf32>
      %c0_12 = arith.constant 0 : index
      %c0_13 = arith.constant 0 : index
      %13 = vector.load %arg5[%c0_12, %c0_13] : memref<1x128xf32, #tpu.memory_space<vmem>>, vector<1x128xf32>
      %14 = vector.broadcast %13 : vector<1x128xf32> to vector<16x128xf32>
      %15 = arith.addf %12, %14 : vector<16x128xf32>
      %c0_14 = arith.constant 0 : index
      %c0_15 = arith.constant 0 : index
      %16 = vector.load %arg6[%c0_14, %c0_15] : memref<16x128xf32, #tpu.memory_space<vmem>>, vector<16x128xf32>
      tpu.vector_store %arg6[%c0_14, %c0_15], %15 {strides = array<i32>} : memref<16x128xf32, #tpu.memory_space<vmem>>, vector<16x128xf32>,
    } else {
    }
    return
  }
  func.func @transform_0(%arg0: i32, %arg1: i32, %arg2: i32) -> (i32, i32) {
    %c0_i32 = arith.constant 0 : i32
    return %arg0, %arg2 : i32, i32
  }
  func.func @transform_1(%arg0: i32, %arg1: i32, %arg2: i32) -> (i32, i32) {
    %c0_i32 = arith.constant 0 : i32
    return %arg2, %arg1 : i32, i32
  }
  func.func @transform_2(%arg0: i32, %arg1: i32, %arg2: i32) -> (i32, i32) {
    %c0_i32 = arith.constant 0 : i32
    %c0_i32_0 = arith.constant 0 : i32
    return %c0_i32, %arg1 : i32, i32
  }
  func.func @transform_3(%arg0: i32, %arg1: i32, %arg2: i32) -> (i32, i32) {
    %c0_i32 = arith.constant 0 : i32
    return %arg0, %arg1 : i32, i32
  }
}

</mosaic_0001>

<llo_original>
// kernel: head_forward.1
$region0: #{head_forward.1}
  #allocation0 [shape = 'u32[]', space=smem, size = 0x4, offset = 0x4, fixed_abs, tag = 'smem constant byte address 0x4 - core index']
  #allocation1 [shape = 'u32[144,128]{1,0:T(1,128)}', space=vmem, size = 0x12000, scoped, tag = 'internal scratch']
  #allocation2 [shape = 'f32[16,128]{1,0:T(8,128)}', space=vmem, size = 0x2000, scoped, tag = 'scratch operand']
  %s0 = inlined_call_operand.hbm [shape: f32[32,512], index: 0, kind: input, shape index: {}]
  %s1 = inlined_call_operand.hbm [shape: f32[512,128], index: 1, kind: input, shape index: {}]
  %s2 = inlined_call_operand.vmem [shape: f32[1,128], index: 2, kind: input, shape index: {}]
  %s3 = inlined_call_operand.vmem [shape: f32[32,128], index: 3, kind: output, shape index: {}]
  %s4 = sld [smem:[#allocation0]]
  $region61: #{head_forward.1} parent=0
    _
  %s6 = ssub.s32 1, %s4
  %s7 = scalar_select 0, %s6, %s4
  $region1: #{head_forward.1} parent=0
    #allocation3 [shape = 'u8[65536]{0}', space=vmem, size = 0x10000, scoped, tag = 'input window, operand 0']
    #allocation4 [shape = 's32[2]{0}', space=sflag, size = 0x8, scoped, tag = 'scoped memory for head_forward.1']
    #allocation5 [shape = 'u8[262144]{0}', space=vmem, size = 0x40000, scoped, tag = 'input window, operand 1, single buffered']
    #allocation6 [shape = 's32[1]{0}', space=sflag, size = 0x4, scoped, tag = 'scoped memory for head_forward.1']
    %8 = vsyncpa [#allocation4], 0
    %s9 = scalar_lea.sflag [#allocation4], 1
    %10 = vsyncpa %s9, 0
    %11 = vsyncpa [#allocation6], 0
    loop: start=0, step=1, limit=4
    $region2: #{head_forward.1} parent=1 // loop_pre_header
      _
    $region3: #{head_forward.1} parent=1 // loop_header
      %s13 = sphi 0, %s17
      %p14 = scmp.ge.s32.totalorder %s13, 4
      %s20 = sphi 0, %s39
      %s21 = sphi 0, %s35
      %s22 = sphi 0, %s31
      %s23 = sphi 0, %s20
      %s24 = sphi 0, %s21
      %s25 = sphi 0, %s22
      %s26 = sphi 0, %s23
      %s27 = sphi 0, %s24
      %s28 = sphi 0, %s25
      %s44 = sphi 0, %s46
      %s47 = sphi 0, %s44
      %s48 = sphi 0, %s47
      %s64 = sphi 0, %s48
      %s72 = sphi 0, %s74
      %s75 = sphi 0, %s72
      %s76 = sphi 0, %s75
      %s92 = sphi 0, %s76
      %s98 = sphi 0, %s100
      %s101 = sphi 0, %s98
      %s102 = sphi 0, %s101
      %s118 = sphi 0, %s102
      %s126 = sphi 0, %s128
      %s129 = sphi 0, %s126
      %s130 = sphi 0, %s129
      %s146 = sphi 0, %s130
    $region4: #{head_forward.1} parent=1 // loop_header_branch
      %16 = sbr.rel (%p14) target = $region8
    $region5: #{head_forward.1} parent=1 // loop_body
      %s18 = ssub.s32 %s13, 1
      %s19 = ssub.s32 %s13, 2
      %s29 = sadd.s32 1, %s22
      %p30 = scmp.ge.s32.totalorder %s29, 1
      %s31 = scalar_select %p30, 0, %s29
      %s32 = sadd.s32 1, %s21
      %s33 = scalar_select %p30, %s32, %s21
      %p34 = scmp.ge.s32.totalorder %s33, 1
      %s35 = scalar_select %p34, 0, %s33
      %s36 = sadd.s32 1, %s20
      %s37 = scalar_select %p34, %s36, %s20
      %p38 = scmp.ge.s32.totalorder %s37, 2
      %s39 = scalar_select %p38, 0, %s37
      %s40 = ssub.s32 %s20, %s39
      %s41 = ssub.s32 %s22, %s31
      %s42 = sor.u32 %s40, %s41
      %p43 = scmp.eq.s32.totalorder %s42, 0
      %s45 = sadd.s32 %s44, 1
      %s46 = scalar_select %p43, %s44, %s45
      %p49 = pneg %p43
      %p50 = scmp.eq.s32.totalorder %s13, 1
      %p51 = por %p49, %p50
      %p52 = scmp.ne.s32.totalorder %s44, %s47
      %p53 = scmp.eq.s32.totalorder %s13, 0
      %p54 = por %p52, %p53
      %p55 = scmp.ne.s32.totalorder %s44, %s47
      %p56 = scmp.eq.s32.totalorder %s18, 1
      %p57 = por %p55, %p56
      %p58 = scmp.ne.s32.totalorder %s47, %s48
      %p59 = scmp.eq.s32.totalorder %s18, 0
      %p60 = por %p58, %p59
      %p61 = scmp.ne.s32.totalorder %s47, %s48
      %p62 = scmp.eq.s32.totalorder %s19, 1
      %p63 = por %p61, %p62
      %p65 = scmp.ne.s32.totalorder %s48, %s64
      %p66 = scmp.eq.s32.totalorder %s19, 0
      %p67 = por %p65, %p66
      %s68 = ssub.s32 %s22, %s31
      %s69 = ssub.s32 %s21, %s35
      %s70 = sor.u32 %s68, %s69
      %p71 = scmp.eq.s32.totalorder %s70, 0
      %s73 = sadd.s32 %s72, 1
      %s74 = scalar_select %p71, %s72, %s73
      %p77 = pneg %p71
      %p78 = scmp.eq.s32.totalorder %s13, 1
      %p79 = por %p77, %p78
      %p80 = scmp.ne.s32.totalorder %s72, %s75
      %p81 = scmp.eq.s32.totalorder %s13, 0
      %p82 = por %p80, %p81
      %p83 = scmp.ne.s32.totalorder %s72, %s75
      %p84 = scmp.eq.s32.totalorder %s18, 1
      %p85 = por %p83, %p84
      %p86 = scmp.ne.s32.totalorder %s75, %s76
      %p87 = scmp.eq.s32.totalorder %s18, 0
      %p88 = por %p86, %p87
      %p89 = scmp.ne.s32.totalorder %s75, %s76
      %p90 = scmp.eq.s32.totalorder %s19, 1
      %p91 = por %p89, %p90
      %p93 = scmp.ne.s32.totalorder %s76, %s92
      %p94 = scmp.eq.s32.totalorder %s19, 0
      %p95 = por %p93, %p94
      %s96 = ssub.s32 %s21, %s35
      %p97 = scmp.eq.s32.totalorder %s96, 0
      %s99 = sadd.s32 %s98, 1
      %s100 = scalar_select %p97, %s98, %s99
      %p103 = pneg %p97
      %p104 = scmp.eq.s32.totalorder %s13, 1
      %p105 = por %p103, %p104
      %p106 = scmp.ne.s32.totalorder %s98, %s101
      %p107 = scmp.eq.s32.totalorder %s13, 0
      %p108 = por %p106, %p107
      %p109 = scmp.ne.s32.totalorder %s98, %s101
      %p110 = scmp.eq.s32.totalorder %s18, 1
      %p111 = por %p109, %p110
      %p112 = scmp.ne.s32.totalorder %s101, %s102
      %p113 = scmp.eq.s32.totalorder %s18, 0
      %p114 = por %p112, %p113
      %p115 = scmp.ne.s32.totalorder %s101, %s102
      %p116 = scmp.eq.s32.totalorder %s19, 1
      %p117 = por %p115, %p116
      %p119 = scmp.ne.s32.totalorder %s102, %s118
      %p120 = scmp.eq.s32.totalorder %s19, 0
      %p121 = por %p119, %p120
      %s122 = ssub.s32 %s20, %s39
      %s123 = ssub.s32 %s21, %s35
      %s124 = sor.u32 %s122, %s123
      %p125 = scmp.eq.s32.totalorder %s124, 0
      %s127 = sadd.s32 %s126, 1
      %s128 = scalar_select %p125, %s126, %s127
      %p131 = pneg %p125
      %p132 = scmp.eq.s32.totalorder %s13, 1
      %p133 = por %p131, %p132
      %p134 = scmp.ne.s32.totalorder %s126, %s129
      %p135 = scmp.eq.s32.totalorder %s13, 0
      %p136 = por %p134, %p135
      %p137 = scmp.ne.s32.totalorder %s126, %s129
      %p138 = scmp.eq.s32.totalorder %s18, 1
      %p139 = por %p137, %p138
      %p140 = scmp.ne.s32.totalorder %s129, %s130
      %p141 = scmp.eq.s32.totalorder %s18, 0
      %p142 = por %p140, %p141
      %p143 = scmp.ne.s32.totalorder %s129, %s130
      %p144 = scmp.eq.s32.totalorder %s19, 1
      %p145 = por %p143, %p144
      %p147 = scmp.ne.s32.totalorder %s130, %s146
      %p148 = scmp.eq.s32.totalorder %s19, 0
      %p149 = por %p147, %p148
      %p150 = scmp.le.s32.totalorder 1, %s13
      %p151 = scmp.lt.s32.totalorder %s13, 3
      %p152 = pnand %p150, %p151
      %p153 = pneg %p152
      // Predicated region
      $region9: #{head_forward.1} parent=5 // pred_check
        _
      $region10: #{head_forward.1} parent=5 // pred_check_branch
        %155 = sbr.rel (%p152) target = $region12
      $region11: #{head_forward.1} parent=5 // pred_region
        %s156 = ssub.s32 %s13, 1
        // Predicated region
        $region13: #{head_forward.1} parent=11 // pred_check
          %p157 = pneg %p88
        $region14: #{head_forward.1} parent=11 // pred_check_branch
          %159 = sbr.rel (%p157) target = $region16
        $region15: #{head_forward.1} parent=11 // pred_region
          %s160 = smul.u32 64, %s25
          %s162 = ssub.s32 8192, 8192
          %163 = vsyncadd [#allocation6], %s162
          %s164 = sadd.s32 %s24, %s160
          %s165 = smul.addr %s164, 128
          %s166 = scalar_lea.hbm %s1, %s165
          %s167 = sshll.u32 [#allocation5], 4
          %s168 = int_to_ptr.vmem [resolvable:$true] %s167
          %173 = dma.hbm_to_vmem [thread:$0]  %s166, 8192, %s168, [#allocation6], 128, 128, 8
        $region16: #{head_forward.1} parent=11 // pred_fallthru
          _
        // Predicated region
        $region17: #{head_forward.1} parent=11 // pred_check
          %p174 = pneg %p114
        $region18: #{head_forward.1} parent=11 // pred_check_branch
          %176 = sbr.rel (%p174) target = $region20
        $region19: #{head_forward.1} parent=11 // pred_region
          %p177 = scmp.lt.s32.totalorder %s24, 0
          %s178 = scalar_select %p177, %s24, 0
          %s179 = scalar_lea.vmem %s2, %s178
        $region20: #{head_forward.1} parent=11 // pred_fallthru
          _
      $region12: #{head_forward.1} parent=5 // pred_fallthru
        _
      %p180 = scmp.lt.s32.totalorder %s13, 2
      // Predicated region
      $region21: #{head_forward.1} parent=5 // pred_check
        %p181 = pneg %p180
      $region22: #{head_forward.1} parent=5 // pred_check_branch
        %183 = sbr.rel (%p181) target = $region24
      $region23: #{head_forward.1} parent=5 // pred_region
        // Predicated region
        $region25: #{head_forward.1} parent=23 // pred_check
          %p184 = pneg %p54
        $region26: #{head_forward.1} parent=23 // pred_check_branch
          %186 = sbr.rel (%p184) target = $region28
        $region27: #{head_forward.1} parent=23 // pred_region
          %s187 = sand.u32 %s44, 1
          %s188 = scalar_lea.sflag [#allocation4], %s187
          %s189 = sand.u32 %s44, 1
          %s190 = smul.addr %s189, 64
          %s191 = scalar_lea.vmem [#allocation3], %s190
          %s192 = smul.u32 2, %s20
          %s193 = smul.u32 4, %s22
          %s195 = ssub.s32 1024, 1024
          %196 = vsyncadd %s188, %s195
          %s197 = smul.addr %s192, 4
          %s198 = sadd.s32 %s193, %s197
          %s199 = smul.addr %s198, 128
          %s200 = scalar_lea.hbm %s0, %s199
          %s201 = sshll.u32 %s191, 4
          %s202 = int_to_ptr.vmem [resolvable:$true] %s201
          %207 = dma.hbm_to_vmem [thread:$0]  %s200, 1024, %s202, %s188, 512, 512, 32
        $region28: #{head_forward.1} parent=23 // pred_fallthru
          _
      $region24: #{head_forward.1} parent=5 // pred_fallthru
        _
      %p208 = scmp.le.s32.totalorder 1, %s13
      %p209 = scmp.lt.s32.totalorder %s13, 3
      %p210 = pnand %p208, %p209
      %p211 = pneg %p210
      // Predicated region
      $region29: #{head_forward.1} parent=5 // pred_check
        _
      $region30: #{head_forward.1} parent=5 // pred_check_branch
        %213 = sbr.rel (%p210) target = $region32
      $region31: #{head_forward.1} parent=5 // pred_region
        %s214 = ssub.s32 %s13, 1
        %s215 = sand.u32 %s47, 1
        %s216 = scalar_lea.sflag [#allocation4], %s215
        %s217 = sand.u32 %s47, 1
        %s218 = smul.addr %s217, 64
        %s219 = scalar_lea.vmem [#allocation3], %s218
        // Predicated region
        $region33: #{head_forward.1} parent=31 // pred_check
          %p220 = pneg %p60
        $region34: #{head_forward.1} parent=31 // pred_check_branch
          %222 = sbr.rel (%p220) target = $region36
        $region35: #{head_forward.1} parent=31 // pred_region
          %223 = dma.done %s216, 1024
        $region36: #{head_forward.1} parent=31 // pred_fallthru
          _
        // Predicated region
        $region37: #{head_forward.1} parent=31 // pred_check
          %p224 = pneg %p88
        $region38: #{head_forward.1} parent=31 // pred_check_branch
          %226 = sbr.rel (%p224) target = $region40
        $region39: #{head_forward.1} parent=31 // pred_region
          %227 = dma.done [#allocation6], 8192
        $region40: #{head_forward.1} parent=31 // pred_fallthru
          _
        %s228 = sand.u32 %s47, 1
        %s229 = scalar_lea.sflag [#allocation4], %s228
        %s230 = sand.u32 %s47, 1
        %s231 = smul.addr %s230, 64
        %s232 = scalar_lea.vmem [#allocation3], %s231
        %p233 = pneg %p60
        %p234 = pneg %p57
        %p235 = pneg %p88
        %p236 = pneg %p85
        %p237 = scmp.lt.s32.totalorder %s24, 0
        %s238 = scalar_select %p237, %s24, 0
        %s239 = scalar_lea.vmem %s2, %s238
        %p240 = pneg %p114
        %p241 = pneg %p111
        %p242 = pneg %p142
        %p243 = pneg %p139
        %s244 = smul.u32 2, %s23
        %p245 = scmp.lt.s32.totalorder %s244, 3
        %s246 = scalar_select %p245, %s244, 3
        %p247 = scmp.lt.s32.totalorder %s24, 0
        %s248 = scalar_select %p247, %s24, 0
        %s249 = sadd.s32 %s248, %s246
        %s250 = smul.addr %s249, 8
        %s251 = scalar_lea.vmem %s3, %s250
        %s252 = smul.u32 2, %s23
        %s253 = smul.u32 4, %s25
        %s254 = smul.u32 64, %s25
        %p255 = scmp.lt.s32.totalorder %s24, 0
        %s256 = scalar_select %p255, %s24, 0
        %s257 = scalar_lea.vmem %s2, %s256
        %s258 = smul.u32 2, %s23
        %p259 = scmp.lt.s32.totalorder %s258, 3
        %s260 = scalar_select %p259, %s258, 3
        %p261 = scmp.lt.s32.totalorder %s24, 0
        %s262 = scalar_select %p261, %s24, 0
        %s263 = sadd.s32 %s262, %s260
        %s264 = smul.addr %s263, 8
        %s265 = scalar_lea.vmem %s3, %s264
        %s266 = smul.u32 2, %s23
        %p267 = scmp.eq.s32.totalorder %s25, 0
        // Predicated region
        $region41: #{head_forward.1} parent=31 // pred_check
          %p268 = pneg %p267
        $region42: #{head_forward.1} parent=31 // pred_check_branch
          %270 = sbr.rel (%p268) target = $region44
        $region43: #{head_forward.1} parent=31 // pred_region
          %271 = vst [vmem:[#allocation2] sm:$0xff] 0.0
          %272 = vst [vmem:[#allocation2 + $0x8] sm:$0xff] 0.0
        $region44: #{head_forward.1} parent=31 // pred_fallthru
          _
        %v273 = vld [vmem:[#allocation2] sm:$0xff]
        %v274 = vld [vmem:[#allocation2 + $0x8] sm:$0xff]
        %v275 = vld [vmem:[%s219] sm:$0xff]
        %v276 = vld [vmem:[%s219 + $0x8] sm:$0xff]
        %v277 = vld [vmem:[%s219 + $0x10] sm:$0xff]
        %v278 = vld [vmem:[%s219 + $0x18] sm:$0xff]
        %v279 = vld [vmem:[%s219 + $0x20] sm:$0xff]
        %v280 = vld [vmem:[%s219 + $0x28] sm:$0xff]
        %v281 = vld [vmem:[%s219 + $0x30] sm:$0xff]
        %v282 = vld [vmem:[%s219 + $0x38] sm:$0xff]
        %v283 = vld [vmem:[#allocation5] sm:$0xff]
        %v284 = vld [vmem:[#allocation5 + $0x8] sm:$0xff]
        %v285 = vld [vmem:[#allocation5 + $0x10] sm:$0xff]
        %v286 = vld [vmem:[#allocation5 + $0x18] sm:$0xff]
        %v287 = vld [vmem:[#allocation5 + $0x20] sm:$0xff]
        %v288 = vld [vmem:[#allocation5 + $0x28] sm:$0xff]
        %v289 = vld [vmem:[#allocation5 + $0x30] sm:$0xff]
        %v290 = vld [vmem:[#allocation5 + $0x38] sm:$0xff]
        %v291 = vld [vmem:[#allocation5 + $0x40] sm:$0xff]
        %v292 = vld [vmem:[#allocation5 + $0x48] sm:$0xff]
        %v293 = vld [vmem:[#allocation5 + $0x50] sm:$0xff]
        %v294 = vld [vmem:[#allocation5 + $0x58] sm:$0xff]
        %v295 = vld [vmem:[#allocation5 + $0x60] sm:$0xff]
        %v296 = vld [vmem:[#allocation5 + $0x68] sm:$0xff]
        %v297 = vld [vmem:[#allocation5 + $0x70] sm:$0xff]
        %v298 = vld [vmem:[#allocation5 + $0x78] sm:$0xff]
        %v299 = vld [vmem:[#allocation5 + $0x80] sm:$0xff]
        %v300 = vld [vmem:[#allocation5 + $0x88] sm:$0xff]
        %v301 = vld [vmem:[#allocation5 + $0x90] sm:$0xff]
        %v302 = vld [vmem:[#allocation5 + $0x98] sm:$0xff]
        %v303 = vld [vmem:[#allocation5 + $0xa0] sm:$0xff]
        %v304 = vld [vmem:[#allocation5 + $0xa8] sm:$0xff]
        %v305 = vld [vmem:[#allocation5 + $0xb0] sm:$0xff]
        %v306 = vld [vmem:[#allocation5 + $0xb8] sm:$0xff]
        %v307 = vld [vmem:[#allocation5 + $0xc0] sm:$0xff]
        %v308 = vld [vmem:[#allocation5 + $0xc8] sm:$0xff]
        %v309 = vld [vmem:[#allocation5 + $0xd0] sm:$0xff]
        %v310 = vld [vmem:[#allocation5 + $0xd8] sm:$0xff]
        %v311 = vld [vmem:[#allocation5 + $0xe0] sm:$0xff]
        %v312 = vld [vmem:[#allocation5 + $0xe8] sm:$0xff]
        %v313 = vld [vmem:[#allocation5 + $0xf0] sm:$0xff]
        %v314 = vld [vmem:[#allocation5 + $0xf8] sm:$0xff]
        %v315 = vld [vmem:[#allocation5 + $0x100] sm:$0xff]
        %v316 = vld [vmem:[#allocation5 + $0x108] sm:$0xff]
        %v317 = vld [vmem:[#allocation5 + $0x110] sm:$0xff]
        %v318 = vld [vmem:[#allocation5 + $0x118] sm:$0xff]
        %v319 = vld [vmem:[#allocation5 + $0x120] sm:$0xff]
        %v320 = vld [vmem:[#allocation5 + $0x128] sm:$0xff]
        %v321 = vld [vmem:[#allocation5 + $0x130] sm:$0xff]
        %v322 = vld [vmem:[#allocation5 + $0x138] sm:$0xff]
        %v323 = vld [vmem:[#allocation5 + $0x140] sm:$0xff]
        %v324 = vld [vmem:[#allocation5 + $0x148] sm:$0xff]
        %v325 = vld [vmem:[#allocation5 + $0x150] sm:$0xff]
        %v326 = vld [vmem:[#allocation5 + $0x158] sm:$0xff]
        %v327 = vld [vmem:[#allocation5 + $0x160] sm:$0xff]
        %v328 = vld [vmem:[#allocation5 + $0x168] sm:$0xff]
        %v329 = vld [vmem:[#allocation5 + $0x170] sm:$0xff]
        %v330 = vld [vmem:[#allocation5 + $0x178] sm:$0xff]
        %v331 = vld [vmem:[#allocation5 + $0x180] sm:$0xff]
        %v332 = vld [vmem:[#allocation5 + $0x188] sm:$0xff]
        %v333 = vld [vmem:[#allocation5 + $0x190] sm:$0xff]
        %v334 = vld [vmem:[#allocation5 + $0x198] sm:$0xff]
        %v335 = vld [vmem:[#allocation5 + $0x1a0] sm:$0xff]
        %v336 = vld [vmem:[#allocation5 + $0x1a8] sm:$0xff]
        %v337 = vld [vmem:[#allocation5 + $0x1b0] sm:$0xff]
        %v338 = vld [vmem:[#allocation5 + $0x1b8] sm:$0xff]
        %v339 = vld [vmem:[#allocation5 + $0x1c0] sm:$0xff]
        %v340 = vld [vmem:[#allocation5 + $0x1c8] sm:$0xff]
        %v341 = vld [vmem:[#allocation5 + $0x1d0] sm:$0xff]
        %v342 = vld [vmem:[#allocation5 + $0x1d8] sm:$0xff]
        %v343 = vld [vmem:[#allocation5 + $0x1e0] sm:$0xff]
        %v344 = vld [vmem:[#allocation5 + $0x1e8] sm:$0xff]
        %v345 = vld [vmem:[#allocation5 + $0x1f0] sm:$0xff]
        %v346 = vld [vmem:[#allocation5 + $0x1f8] sm:$0xff]
        %347 = vmatprep.subr.mxu0 0.0
        %348 = vmatpush1.msra.mxu0 %v298
        %349 = vmatprep.subr.mxu0 0.0
        %350 = vmatpush1.msra.mxu0 %v297
        %351 = vmatprep.subr.mxu0 0.0
        %352 = vmatpush1.msra.mxu0 %v296
        %353 = vmatprep.subr.mxu0 0.0
        %354 = vmatpush1.msra.mxu0 %v295
        %355 = vmatprep.subr.mxu0 0.0
        %356 = vmatpush1.msra.mxu0 %v294
        %357 = vmatprep.subr.mxu0 0.0
        %358 = vmatpush1.msra.mxu0 %v293
        %359 = vmatprep.subr.mxu0 0.0
        %360 = vmatpush1.msra.mxu0 %v292
        %361 = vmatprep.subr.mxu0 0.0
        %362 = vmatpush1.msra.mxu0 %v291
        %363 = vmatprep.subr.mxu0 0.0
        %364 = vmatpush1.msra.mxu0 %v290
        %365 = vmatprep.subr.mxu0 0.0
        %366 = vmatpush1.msra.mxu0 %v289
        %367 = vmatprep.subr.mxu0 0.0
        %368 = vmatpush1.msra.mxu0 %v288
        %369 = vmatprep.subr.mxu0 0.0
        %370 = vmatpush1.msra.mxu0 %v287
        %371 = vmatprep.subr.mxu0 0.0
        %372 = vmatpush1.msra.mxu0 %v286
        %373 = vmatprep.subr.mxu0 0.0
        %374 = vmatpush1.msra.mxu0 %v285
        %375 = vmatprep.subr.mxu0 0.0
        %376 = vmatpush1.msra.mxu0 %v284
        %377 = vmatprep.subr.mxu0 0.0
        %378 = vmatpush1.msra.mxu0 %v283
        %379 = vmatprep.subr.mxu0 0.0
        %380 = vmatpush2.msra.mxu0 %v314
        %381 = vmatprep.subr.mxu0 0.0
        %382 = vmatpush2.msra.mxu0 %v313
        %383 = vmatprep.subr.mxu0 0.0
        %384 = vmatpush2.msra.mxu0 %v312
        %385 = vmatprep.subr.mxu0 0.0
        %386 = vmatpush2.msra.mxu0 %v311
        %387 = vmatprep.subr.mxu0 0.0
        %388 = vmatpush2.msra.mxu0 %v310
        %389 = vmatprep.subr.mxu0 0.0
        %390 = vmatpush2.msra.mxu0 %v309
        %391 = vmatprep.subr.mxu0 0.0
        %392 = vmatpush2.msra.mxu0 %v308
        %393 = vmatprep.subr.mxu0 0.0
        %394 = vmatpush2.msra.mxu0 %v307
        %395 = vmatprep.subr.mxu0 0.0
        %396 = vmatpush2.msra.mxu0 %v306
        %397 = vmatprep.subr.mxu0 0.0
        %398 = vmatpush2.msra.mxu0 %v305
        %399 = vmatprep.subr.mxu0 0.0
        %400 = vmatpush2.msra.mxu0 %v304
        %401 = vmatprep.subr.mxu0 0.0
        %402 = vmatpush2.msra.mxu0 %v303
        %403 = vmatprep.subr.mxu0 0.0
        %404 = vmatpush2.msra.mxu0 %v302
        %405 = vmatprep.subr.mxu0 0.0
        %406 = vmatpush2.msra.mxu0 %v301
        %407 = vmatprep.subr.mxu0 0.0
        %408 = vmatpush2.msra.mxu0 %v300
        %409 = vmatprep.subr.mxu0 0.0
        %410 = vmatpush2.msra.mxu0 %v299
        %411 = vmatprep.mubr.f32.mxu0 %v276
        %412 = vmatmul.mubr.f32.gmra.mxu0 %v275
        %v413 = vpop.f32.mrf.mxu0
        %v414 = vadd.f32 0.0, %v413
        %v415 = vpop.f32.mrf.mxu0
        %416 = vmatprep.mubr.f32.mxu0 %v280
        %417 = vmatmul.mubr.f32.gmra.mxu0 %v279
        %v418 = vpop.f32.mrf.mxu0
        %v419 = vadd.f32 0.0, %v418
        %v420 = vpop.f32.mrf.mxu0
        %421 = vdwg.mxu0
        %422 = vmatprep.subr.mxu0 0.0
        %423 = vmatpush1.msra.mxu0 %v330
        %424 = vmatprep.subr.mxu0 0.0
        %425 = vmatpush1.msra.mxu0 %v329
        %426 = vmatprep.subr.mxu0 0.0
        %427 = vmatpush1.msra.mxu0 %v328
        %428 = vmatprep.subr.mxu0 0.0
        %429 = vmatpush1.msra.mxu0 %v327
        %430 = vmatprep.subr.mxu0 0.0
        %431 = vmatpush1.msra.mxu0 %v326
        %432 = vmatprep.subr.mxu0 0.0
        %433 = vmatpush1.msra.mxu0 %v325
        %434 = vmatprep.subr.mxu0 0.0
        %435 = vmatpush1.msra.mxu0 %v324
        %436 = vmatprep.subr.mxu0 0.0
        %437 = vmatpush1.msra.mxu0 %v323
        %438 = vmatprep.subr.mxu0 0.0
        %439 = vmatpush1.msra.mxu0 %v322
        %440 = vmatprep.subr.mxu0 0.0
        %441 = vmatpush1.msra.mxu0 %v321
        %442 = vmatprep.subr.mxu0 0.0
        %443 = vmatpush1.msra.mxu0 %v320
        %444 = vmatprep.subr.mxu0 0.0
        %445 = vmatpush1.msra.mxu0 %v319
        %446 = vmatprep.subr.mxu0 0.0
        %447 = vmatpush1.msra.mxu0 %v318
        %448 = vmatprep.subr.mxu0 0.0
        %449 = vmatpush1.msra.mxu0 %v317
        %450 = vmatprep.subr.mxu0 0.0
        %451 = vmatpush1.msra.mxu0 %v316
        %452 = vmatprep.subr.mxu0 0.0
        %453 = vmatpush1.msra.mxu0 %v315
        %454 = vmatprep.subr.mxu0 0.0
        %455 = vmatpush2.msra.mxu0 %v346
        %456 = vmatprep.subr.mxu0 0.0
        %457 = vmatpush2.msra.mxu0 %v345
        %458 = vmatprep.subr.mxu0 0.0
        %459 = vmatpush2.msra.mxu0 %v344
        %460 = vmatprep.subr.mxu0 0.0
        %461 = vmatpush2.msra.mxu0 %v343
        %462 = vmatprep.subr.mxu0 0.0
        %463 = vmatpush2.msra.mxu0 %v342
        %464 = vmatprep.subr.mxu0 0.0
        %465 = vmatpush2.msra.mxu0 %v341
        %466 = vmatprep.subr.mxu0 0.0
        %467 = vmatpush2.msra.mxu0 %v340
        %468 = vmatprep.subr.mxu0 0.0
        %469 = vmatpush2.msra.mxu0 %v339
        %470 = vmatprep.subr.mxu0 0.0
        %471 = vmatpush2.msra.mxu0 %v338
        %472 = vmatprep.subr.mxu0 0.0
        %473 = vmatpush2.msra.mxu0 %v337
        %474 = vmatprep.subr.mxu0 0.0
        %475 = vmatpush2.msra.mxu0 %v336
        %476 = vmatprep.subr.mxu0 0.0
        %477 = vmatpush2.msra.mxu0 %v335
        %478 = vmatprep.subr.mxu0 0.0
        %479 = vmatpush2.msra.mxu0 %v334
        %480 = vmatprep.subr.mxu0 0.0
        %481 = vmatpush2.msra.mxu0 %v333
        %482 = vmatprep.subr.mxu0 0.0
        %483 = vmatpush2.msra.mxu0 %v332
        %484 = vmatprep.subr.mxu0 0.0
        %485 = vmatpush2.msra.mxu0 %v331
        %486 = vmatprep.mubr.f32.mxu0 %v278
        %487 = vmatmul.mubr.f32.gmra.mxu0 %v277
        %v488 = vpop.f32.mrf.mxu0
        %v489 = vadd.f32 %v414, %v488
        %v490 = vpop.f32.mrf.mxu0
        %491 = vmatprep.mubr.f32.mxu0 %v282
        %492 = vmatmul.mubr.f32.gmra.mxu0 %v281
        %v493 = vpop.f32.mrf.mxu0
        %v494 = vadd.f32 %v419, %v493
        %v495 = vpop.f32.mrf.mxu0
        %496 = vdwg.mxu0
        %v497 = vadd.f32 %v273, %v489
        %v498 = vadd.f32 %v274, %v494
        %499 = vst [vmem:[#allocation2] sm:$0xff] %v497
        %500 = vst [vmem:[#allocation2 + $0x8] sm:$0xff] %v498
        // Predicated region
        $region45: #{head_forward.1} parent=31 // pred_check
          %p501 = pneg %p267
        $region46: #{head_forward.1} parent=31 // pred_check_branch
          %503 = sbr.rel (%p501) target = $region48
        $region47: #{head_forward.1} parent=31 // pred_region
          %v504 = vld [vmem:[#allocation2] sm:$0xff]
          %v505 = vld [vmem:[#allocation2 + $0x8] sm:$0xff]
          %v506 = vld [vmem:[%s257] sm:$0x1]
          %v508 = vlaneseq
          %v509 = vshrl.u32 %v508, 7
          %v510 = vsub.s32 0, %v509
          %v511 = vrot.slane %v506, %v510
          %v513 = vadd.f32 %v504, %v511
          %v514 = vadd.f32 %v505, %v511
          %515 = vst [vmem:[%s265] sm:$0xff] %v513
          %516 = vst [vmem:[%s265 + $0x8] sm:$0xff] %v514
        $region48: #{head_forward.1} parent=31 // pred_fallthru
          _
        %s517 = smul.u32 2, %s23
        %p518 = scmp.lt.s32.totalorder %s517, 3
        %s519 = scalar_select %p518, %s517, 3
        %p520 = scmp.lt.s32.totalorder %s24, 0
        %s521 = scalar_select %p520, %s24, 0
        %s522 = sadd.s32 %s521, %s519
        %s523 = smul.addr %s522, 8
        %s524 = scalar_lea.vmem %s3, %s523
        // Predicated region
        $region49: #{head_forward.1} parent=31 // pred_check
          %p525 = pneg %p139
        $region50: #{head_forward.1} parent=31 // pred_check_branch
          %527 = sbr.rel (%p525) target = $region52
        $region51: #{head_forward.1} parent=31 // pred_region
          %s528 = smul.u32 2, %s23
        $region52: #{head_forward.1} parent=31 // pred_fallthru
          _
      $region32: #{head_forward.1} parent=5 // pred_fallthru
        _
      %p529 = scmp.le.s32.totalorder 2, %s13
      // Predicated region
      $region53: #{head_forward.1} parent=5 // pred_check
        %p530 = pneg %p529
      $region54: #{head_forward.1} parent=5 // pred_check_branch
        %532 = sbr.rel (%p530) target = $region56
      $region55: #{head_forward.1} parent=5 // pred_region
        %s533 = ssub.s32 %s13, 2
        // Predicated region
        $region57: #{head_forward.1} parent=55 // pred_check
          %p534 = pneg %p145
        $region58: #{head_forward.1} parent=55 // pred_check_branch
          %536 = sbr.rel (%p534) target = $region60
        $region59: #{head_forward.1} parent=55 // pred_region
          %s537 = smul.u32 2, %s26
          %p538 = scmp.lt.s32.totalorder %s537, 3
          %s539 = scalar_select %p538, %s537, 3
          %p540 = scmp.lt.s32.totalorder %s27, 0
          %s541 = scalar_select %p540, %s27, 0
          %s542 = sadd.s32 %s541, %s539
          %s543 = smul.addr %s542, 8
          %s544 = scalar_lea.vmem %s3, %s543
        $region60: #{head_forward.1} parent=55 // pred_fallthru
          _
      $region56: #{head_forward.1} parent=5 // pred_fallthru
        _
    $region6: #{head_forward.1} parent=1 // loop_footer
      %s17 = sadd.s32 1, %s13
    $region7: #{head_forward.1} parent=1 // loop_footer_branch
      %12 = sbr.rel target = $region3
    $region8: #{head_forward.1} parent=1 // loop_exit
      _
    %545 = vsyncpa [#allocation4], 1
    %s546 = scalar_lea.sflag [#allocation4], 1
    %547 = vsyncpa %s546, 1
    %548 = vsyncpa [#allocation6], 1

</llo_original>
